<compile_context>
chip_gen: v6e
topology: v6e:2x2x1
jax: 0.10.0
libtpu: 0.0.40
codegen_flags: <defaults>
</compile_context>

<pallas_src>
import functools

import jax
import jax.numpy as jnp
from jax.experimental import pallas as pl
from jax.experimental.pallas import tpu as pltpu


def _gga_kernel(x_ref, kT_ref, v_ref, wq_ref, bq_ref, gamma_ref, o_ref,
                q_sc, m_sc, l_sc, acc_sc, *, exp_dtype):
    kt = pl.program_id(2)

    @pl.when(kt == 0)
    def _init():
        m_sc[...] = jnp.full_like(m_sc, -jnp.inf)
        l_sc[...] = jnp.zeros_like(l_sc)
        acc_sc[...] = jnp.zeros_like(acc_sc)
        # Q projection once per (batch, query tile); 1/sqrt(C) and bias are
        # already folded into wq_ref / bq_ref by the wrapper.
        x16 = x_ref[0].astype(jnp.bfloat16)                               # (C, TQ)
        q = jnp.dot(wq_ref[...], x16,
                    preferred_element_type=jnp.float32) + bq_ref[...]     # (C8, TQ)
        q_sc[...] = q.astype(jnp.bfloat16)

    # energy^T chunk: keys-major, plain MXU matmul, f32 accumulation.
    energy_t = jnp.dot(kT_ref[0], q_sc[...],
                       preferred_element_type=jnp.float32)                # (TK, TQ)

    # Online softmax over the key (sublane-major) axis.
    m_new = jnp.maximum(m_sc[...], jnp.max(energy_t, axis=0, keepdims=True))  # (1, TQ)
    alpha = jnp.exp(m_sc[...] - m_new)                                        # (1, TQ)
    s = energy_t - m_new
    if exp_dtype == jnp.bfloat16:        # v6e / v7x: bf16 VPU + EUP
        e16 = jnp.exp(s.astype(jnp.bfloat16))
    else:                                # v5e: no bf16 VPU/EUP -> f32 exp
        e16 = jnp.exp(s).astype(jnp.bfloat16)

    # Chunk row-sums via a one-row MXU pass (f32 accumulation, stays (1, TQ)).
    chunk_l = jnp.dot(jnp.ones((1, e16.shape[0]), jnp.bfloat16), e16,
                      preferred_element_type=jnp.float32)                 # (1, TQ)
    l_sc[...] = alpha * l_sc[...] + chunk_l
    acc_sc[...] = alpha * acc_sc[...] + jnp.dot(
        v_ref[0], e16, preferred_element_type=jnp.float32)                # (C, TQ)
    m_sc[...] = m_new

    @pl.when(kt == pl.num_programs(2) - 1)
    def _finalize():
        inv_l = pl.reciprocal(l_sc[...], approx=False)   # exact; only (1, TQ)
        o_ref[0] = x_ref[0] + gamma_ref[0] * (acc_sc[...] * inv_l)


def _softmax_exp_dtype():
    """bf16 softmax exp on v6e/v7x (bf16 VPU/EUP), f32 elsewhere (v5e & older)."""
    try:
        kind = jax.devices()[0].device_kind.lower()
    except Exception:
        return jnp.float32
    return jnp.bfloat16 if ("v6" in kind or "v7" in kind) else jnp.float32


def _vmem_capacity_bytes():
    try:
        return int(pltpu.get_tpu_info().vmem_capacity_bytes)
    except Exception:
        return 64 * 1024 * 1024   # conservative (v7x per-core VMEM)


def _estimate_vmem_bytes(C, C8, tq, tk):
    """Padded footprint of blocks (double-buffered), scratch and temporaries."""
    def pad(n, m):
        return -(-n // m) * m
    f32, bf16 = 4, 2
    b = 0
    b += 2 * pad(C, 8) * pad(tq, 128) * f32          # x query-tile block
    b += 2 * pad(tk, 16) * pad(C8, 128) * bf16       # K^T chunk
    b += 2 * pad(C, 16) * pad(tk, 128) * bf16        # V chunk
    b += 2 * pad(C, 8) * pad(tq, 128) * f32          # output block
    b += 2 * (pad(C8, 16) * pad(C, 128) * bf16 + pad(C8, 8) * 128 * f32)  # weights
    b += pad(C8, 16) * pad(tq, 128) * bf16           # q scratch
    b += 2 * pad(1, 8) * pad(tq, 128) * f32          # running max / sum
    b += pad(C, 8) * pad(tq, 128) * f32              # output accumulator
    b += pad(tk, 8) * pad(tq, 128) * (f32 + bf16)    # energy + probs temporaries
    return b


def geometry_guided_attention(hsi_feat, lidar_elev, params, *, tq=None, tk=None):
    """hsi_feat: (B, C, H, W) f32; lidar_elev: (B, 1, H, W) f32 -> (B, C, H, W)."""
    B, C, H, W = hsi_feat.shape
    HW = H * W
    C8 = C // 8
    scale = 1.0 / (C ** 0.5)

    if tq is None:
        tq = next((t for t in (256, 128) if HW % t == 0), HW)
    if tk is None:
        tk = next((t for t in (512, 256, 128) if HW % t == 0), HW)
    assert HW % tq == 0 and HW % tk == 0, f"HW={HW} must be divisible by tq/tk"
    nq, nk = HW // tq, HW // tk

    # Channel-major: plain reshapes of NCHW, no HBM transposes of x.
    x = hsi_feat.reshape(B, C, HW)
    lid = lidar_elev.reshape(B, 1, HW)

    # PyTorch conv weights (Cout, Cin, 1, 1) -> (Cout, Cin); biases as columns.
    wq = params["wq"].reshape(C8, C)
    bq = params["bq"].reshape(C8, 1)
    wk = params["wk"].reshape(C8, 1)
    bk = params["bk"].reshape(C8, 1)
    wv = params["wv"].reshape(C, C)
    bv = params["bv"].reshape(C, 1)
    gamma = params["gamma"].reshape((1,)).astype(jnp.float32)

    # ---- hoisted once-per-image precompute (tiny 1x1 convs, done in XLA) ----
    k_pre = wk.reshape(1, C8, 1) * lid + bk.reshape(1, C8, 1)           # (B, C8, HW)
    k = jnp.where(k_pre > 0, k_pre, jnp.expm1(k_pre))                   # ELU(alpha=1)
    kT = jnp.swapaxes(k, 1, 2).astype(jnp.bfloat16)                     # (B, HW, C8) keys-major

    v = (jnp.einsum('oc,bcp->bop', wv.astype(jnp.bfloat16), x.astype(jnp.bfloat16),
                    preferred_element_type=jnp.float32)
         + bv.reshape(1, C, 1)).astype(jnp.bfloat16)                    # (B, C, HW)

    wq_s = (wq * scale).astype(jnp.bfloat16)                            # scale folded
    bq_s = (bq * scale).astype(jnp.float32)

    exp_dtype = _softmax_exp_dtype()
    cap = _vmem_capacity_bytes()
    est = _estimate_vmem_bytes(C, C8, tq, tk)
    vmem_limit = int(min(max(2 * est, 32 * 1024 * 1024), cap - 8 * 1024 * 1024))

    kernel = functools.partial(_gga_kernel, exp_dtype=exp_dtype)

    out = pl.pallas_call(
        kernel,
        out_shape=jax.ShapeDtypeStruct((B, C, HW), jnp.float32),
        grid=(B, nq, nk),
        in_specs=[
            pl.BlockSpec((1, C, tq), lambda b, qt, kt: (b, 0, qt)),     # x query tile
            pl.BlockSpec((1, tk, C8), lambda b, qt, kt: (b, kt, 0)),    # K^T key chunk
            pl.BlockSpec((1, C, tk), lambda b, qt, kt: (b, 0, kt)),     # V key chunk
            pl.BlockSpec((C8, C), lambda b, qt, kt: (0, 0)),            # wq * scale (bf16)
            pl.BlockSpec((C8, 1), lambda b, qt, kt: (0, 0)),            # bq * scale (f32)
            pl.BlockSpec(memory_space=pltpu.MemorySpace.SMEM),          # gamma scalar
        ],
        out_specs=pl.BlockSpec((1, C, tq), lambda b, qt, kt: (b, 0, qt)),
        scratch_shapes=[
            pltpu.VMEM((C8, tq), jnp.bfloat16),   # q (per query tile)
            pltpu.VMEM((1, tq), jnp.float32),     # running max
            pltpu.VMEM((1, tq), jnp.float32),     # running sum
            pltpu.VMEM((C, tq), jnp.float32),     # output accumulator
        ],
        compiler_params=pltpu.CompilerParams(
            dimension_semantics=("parallel", "parallel", "arbitrary"),
            vmem_limit_bytes=vmem_limit),
    )(x, kT, v, wq_s, bq_s, gamma)

    return out.reshape(B, C, H, W)


def reference(hsi, lid, p):
    """Pure-JAX mirror of the PyTorch forward (for validation)."""
    B, C, H, W = hsi.shape
    HW = H * W
    C8 = C // 8
    wq = p["wq"].reshape(C8, C)
    wk = p["wk"].reshape(C8, 1)
    wv = p["wv"].reshape(C, C)
    Q = jnp.einsum('oc,bchw->bohw', wq, hsi) + p["bq"][None, :, None, None]
    Kp = jnp.einsum('oc,bchw->bohw', wk, lid) + p["bk"][None, :, None, None]
    K = jnp.where(Kp > 0, Kp, jnp.expm1(Kp))
    V = jnp.einsum('oc,bchw->bohw', wv, hsi) + p["bv"][None, :, None, None]
    Q = Q.reshape(B, C8, HW)
    K = K.reshape(B, C8, HW)
    V = V.reshape(B, C, HW)
    energy = jnp.einsum('bci,bcj->bij', Q, K) / (C ** 0.5)
    attn = jax.nn.softmax(energy, axis=-1)
    out = jnp.einsum('bcj,bij->bci', V, attn).reshape(B, C, H, W)
    return hsi + p["gamma"][0] * out


if __name__ == "__main__":
    B, C, H, W = 2, 32, 16, 16        # hsi_dim=32 -> C//8 = 4, HW = 256
    C8 = C // 8

    keys = jax.random.split(jax.random.PRNGKey(0), 8)
    params = {
        "wq": 0.1 * jax.random.normal(keys[0], (C8, C, 1, 1), jnp.float32),
        "bq": 0.1 * jax.random.normal(keys[1], (C8,), jnp.float32),
        "wk": 0.1 * jax.random.normal(keys[2], (C8, 1, 1, 1), jnp.float32),
        "bk": 0.1 * jax.random.normal(keys[3], (C8,), jnp.float32),
        "wv": 0.1 * jax.random.normal(keys[4], (C, C, 1, 1), jnp.float32),
        "bv": 0.1 * jax.random.normal(keys[5], (C,), jnp.float32),
        "gamma": jnp.full((1,), 0.1, jnp.float32),
    }
    hsi = jax.random.normal(keys[6], (B, C, H, W), jnp.float32)
    lidar = jax.random.normal(keys[7], (B, 1, H, W), jnp.float32)

    # tq=tk=128 -> grid (2, 2, 2): exercises query tiling AND the online-softmax
    # key-chunk loop.
    result = geometry_guided_attention(hsi, lidar, params, tq=128, tk=128)
    result = jax.block_until_ready(result)

    ref = reference(hsi, lidar, params)
    assert result.shape == (B, C, H, W)
    max_err = jnp.max(jnp.abs(result - ref))
    # bf16 MXU operands (energy / probs / V projection) with f32 accumulation.
    assert jnp.allclose(result, ref, atol=1e-2, rtol=1e-2), \
        f"max abs err = {max_err}"

    print("KERNEL_OK")
</pallas_src>

<mosaic_0001>
module attributes {stable_mosaic.version = 11 : i64} {
  func.func @_gga_kernel(%arg0: i32, %arg1: i32, %arg2: i32, %arg3: memref<1x32x128xf32, #tpu.memory_space<vmem>>, %arg4: memref<1x128x4xbf16, #tpu.memory_space<vmem>>, %arg5: memref<1x32x128xbf16, #tpu.memory_space<vmem>>, %arg6: memref<4x32xbf16, #tpu.memory_space<vmem>>, %arg7: memref<4x1xf32, #tpu.memory_space<vmem>>, %arg8: memref<1xf32, #tpu.memory_space<smem>>, %arg9: memref<1x32x128xf32, #tpu.memory_space<vmem>>, %arg10: memref<4x128xbf16, #tpu.memory_space<vmem>>, %arg11: memref<1x128xf32, #tpu.memory_space<vmem>>, %arg12: memref<1x128xf32, #tpu.memory_space<vmem>>, %arg13: memref<32x128xf32, #tpu.memory_space<vmem>>) attributes {dimension_semantics = [#tpu.dimension_semantics<parallel>, #tpu.dimension_semantics<parallel>, #tpu.dimension_semantics<arbitrary>], iteration_bounds = array<i64: 2, 2, 2>, scalar_prefetch = 0 : i64, scratch_operands = 4 : i64, tpu.core_type = #tpu.core_type<tc>, window_params = [{transform_indices = @transform_0, window_bounds = array<i64: 1, 32, 128>}, {transform_indices = @transform_1, window_bounds = array<i64: 1, 128, 4>}, {transform_indices = @transform_2, window_bounds = array<i64: 1, 32, 128>}, {pipeline_mode = #tpu.pipeline_mode<synchronous>, transform_indices = @transform_3, window_bounds = array<i64: 4, 32>}, {pipeline_mode = #tpu.pipeline_mode<synchronous>, transform_indices = @transform_4, window_bounds = array<i64: 4, 1>}, {transform_indices = @transform_5, window_bounds = array<i64: 1>}, {transform_indices = @transform_6, window_bounds = array<i64: 1, 32, 128>}]} {
    %c0_i32 = arith.constant 0 : i32
    %0 = arith.cmpi eq, %arg2, %c0_i32 : i32
    %1 = arith.extui %0 : i1 to i32
    %c0_i32_0 = arith.constant 0 : i32
    %2 = arith.cmpi ne, %1, %c0_i32_0 : i32
    scf.if %2 {
      %cst_27 = arith.constant 0xFF800000 : f32
      %36 = vector.broadcast %cst_27 : f32 to vector<1x128xf32>
      %c0_28 = arith.constant 0 : index
      %c0_29 = arith.constant 0 : index
      %37 = vector.load %arg11[%c0_28, %c0_29] : memref<1x128xf32, #tpu.memory_space<vmem>>, vector<1x128xf32>
      tpu.vector_store %arg11[%c0_28, %c0_29], %36 {strides = array<i32>} : memref<1x128xf32, #tpu.memory_space<vmem>>, vector<1x128xf32>,
      %cst_30 = arith.constant 0.000000e+00 : f32
      %38 = vector.broadcast %cst_30 : f32 to vector<1x128xf32>
      %c0_31 = arith.constant 0 : index
      %c0_32 = arith.constant 0 : index
      %39 = vector.load %arg12[%c0_31, %c0_32] : memref<1x128xf32, #tpu.memory_space<vmem>>, vector<1x128xf32>
      tpu.vector_store %arg12[%c0_31, %c0_32], %38 {strides = array<i32>} : memref<1x128xf32, #tpu.memory_space<vmem>>, vector<1x128xf32>,
      %cst_33 = arith.constant 0.000000e+00 : f32
      %40 = vector.broadcast %cst_33 : f32 to vector<32x128xf32>
      %c0_34 = arith.constant 0 : index
      %c0_35 = arith.constant 0 : index
      %41 = vector.load %arg13[%c0_34, %c0_35] : memref<32x128xf32, #tpu.memory_space<vmem>>, vector<32x128xf32>
      tpu.vector_store %arg13[%c0_34, %c0_35], %40 {strides = array<i32>} : memref<32x128xf32, #tpu.memory_space<vmem>>, vector<32x128xf32>,
      %c0_36 = arith.constant 0 : index
      %c0_37 = arith.constant 0 : index
      %c0_38 = arith.constant 0 : index
      %42 = vector.load %arg3[%c0_36, %c0_37, %c0_38] : memref<1x32x128xf32, #tpu.memory_space<vmem>>, vector<1x32x128xf32>
      %43 = vector.shape_cast %42 : vector<1x32x128xf32> to vector<32x128xf32>
      %44 = arith.truncf %43 : vector<32x128xf32> to vector<32x128xbf16>
      %c0_39 = arith.constant 0 : index
      %c0_40 = arith.constant 0 : index
      %45 = vector.load %arg6[%c0_39, %c0_40] : memref<4x32xbf16, #tpu.memory_space<vmem>>, vector<4x32xbf16>
      %cst_41 = arith.constant dense<0.000000e+00> : vector<4x128xf32>
      %46 = tpu.matmul %45, %44, %cst_41 {dimension_numbers = #tpu.dot_dimension_numbers<[1], [0], [0], [1], [0, 0, 1, 1], [], []>} : vector<4x32xbf16>, vector<32x128xbf16>, vector<4x128xf32> -> vector<4x128xf32>
      %c0_42 = arith.constant 0 : index
      %c0_43 = arith.constant 0 : index
      %47 = vector.load %arg7[%c0_42, %c0_43] : memref<4x1xf32, #tpu.memory_space<vmem>>, vector<4x1xf32>
      %48 = vector.broadcast %47 : vector<4x1xf32> to vector<4x128xf32>
      %49 = arith.addf %46, %48 : vector<4x128xf32>
      %50 = arith.truncf %49 : vector<4x128xf32> to vector<4x128xbf16>
      %c0_44 = arith.constant 0 : index
      %c0_45 = arith.constant 0 : index
      %51 = vector.load %arg10[%c0_44, %c0_45] : memref<4x128xbf16, #tpu.memory_space<vmem>>, vector<4x128xbf16>
      tpu.vector_store %arg10[%c0_44, %c0_45], %50 {strides = array<i32>} : memref<4x128xbf16, #tpu.memory_space<vmem>>, vector<4x128xbf16>,
    } else {
    }
    %c0 = arith.constant 0 : index
    %c0_1 = arith.constant 0 : index
    %c0_2 = arith.constant 0 : index
    %3 = vector.load %arg4[%c0, %c0_1, %c0_2] : memref<1x128x4xbf16, #tpu.memory_space<vmem>>, vector<1x128x4xbf16>
    %4 = vector.shape_cast %3 : vector<1x128x4xbf16> to vector<128x4xbf16>
    %c0_3 = arith.constant 0 : index
    %c0_4 = arith.constant 0 : index
    %5 = vector.load %arg10[%c0_3, %c0_4] : memref<4x128xbf16, #tpu.memory_space<vmem>>, vector<4x128xbf16>
    %cst = arith.constant dense<0.000000e+00> : vector<128x128xf32>
    %6 = tpu.matmul %4, %5, %cst {dimension_numbers = #tpu.dot_dimension_numbers<[1], [0], [0], [1], [0, 0, 1, 1], [], []>} : vector<128x4xbf16>, vector<4x128xbf16>, vector<128x128xf32> -> vector<128x128xf32>
    %c0_5 = arith.constant 0 : index
    %c0_6 = arith.constant 0 : index
    %7 = vector.load %arg11[%c0_5, %c0_6] : memref<1x128xf32, #tpu.memory_space<vmem>>, vector<1x128xf32>
    %cst_7 = arith.constant dense<0xFF800000> : vector<128xf32>
    %8 = vector.multi_reduction <maximumf>, %6, %cst_7 [0] : vector<128x128xf32> to vector<128xf32>
    %9 = vector.shape_cast %8 : vector<128xf32> to vector<1x128xf32>
    %10 = arith.maximumf %7, %9 : vector<1x128xf32>
    %c0_8 = arith.constant 0 : index
    %c0_9 = arith.constant 0 : index
    %11 = vector.load %arg11[%c0_8, %c0_9] : memref<1x128xf32, #tpu.memory_space<vmem>>, vector<1x128xf32>
    %12 = arith.subf %11, %10 : vector<1x128xf32>
    %13 = math.exp %12 : vector<1x128xf32>
    %14 = vector.broadcast %10 : vector<1x128xf32> to vector<128x128xf32>
    %15 = arith.subf %6, %14 : vector<128x128xf32>
    %16 = math.exp %15 : vector<128x128xf32>
    %17 = arith.truncf %16 : vector<128x128xf32> to vector<128x128xbf16>
    %cst_10 = arith.constant 1.000000e+00 : bf16
    %18 = vector.broadcast %cst_10 : bf16 to vector<1x128xbf16>
    %cst_11 = arith.constant dense<0.000000e+00> : vector<1x128xf32>
    %19 = tpu.matmul %18, %17, %cst_11 {dimension_numbers = #tpu.dot_dimension_numbers<[1], [0], [0], [1], [0, 0, 1, 1], [], []>} : vector<1x128xbf16>, vector<128x128xbf16>, vector<1x128xf32> -> vector<1x128xf32>
    %c0_12 = arith.constant 0 : index
    %c0_13 = arith.constant 0 : index
    %20 = vector.load %arg12[%c0_12, %c0_13] : memref<1x128xf32, #tpu.memory_space<vmem>>, vector<1x128xf32>
    %21 = arith.mulf %13, %20 : vector<1x128xf32>
    %22 = arith.addf %21, %19 : vector<1x128xf32>
    %c0_14 = arith.constant 0 : index
    %c0_15 = arith.constant 0 : index
    %23 = vector.load %arg12[%c0_14, %c0_15] : memref<1x128xf32, #tpu.memory_space<vmem>>, vector<1x128xf32>
    tpu.vector_store %arg12[%c0_14, %c0_15], %22 {strides = array<i32>} : memref<1x128xf32, #tpu.memory_space<vmem>>, vector<1x128xf32>,
    %c0_16 = arith.constant 0 : index
    %c0_17 = arith.constant 0 : index
    %24 = vector.load %arg13[%c0_16, %c0_17] : memref<32x128xf32, #tpu.memory_space<vmem>>, vector<32x128xf32>
    %25 = vector.broadcast %13 : vector<1x128xf32> to vector<32x128xf32>
    %26 = arith.mulf %25, %24 : vector<32x128xf32>
    %c0_18 = arith.constant 0 : index
    %c0_19 = arith.constant 0 : index
    %c0_20 = arith.constant 0 : index
    %27 = vector.load %arg5[%c0_18, %c0_19, %c0_20] : memref<1x32x128xbf16, #tpu.memory_space<vmem>>, vector<1x32x128xbf16>
    %28 = vector.shape_cast %27 : vector<1x32x128xbf16> to vector<32x128xbf16>
    %cst_21 = arith.constant dense<0.000000e+00> : vector<32x128xf32>
    %29 = tpu.matmul %28, %17, %cst_21 {dimension_numbers = #tpu.dot_dimension_numbers<[1], [0], [0], [1], [0, 0, 1, 1], [], []>} : vector<32x128xbf16>, vector<128x128xbf16>, vector<32x128xf32> -> vector<32x128xf32>
    %30 = arith.addf %26, %29 : vector<32x128xf32>
    %c0_22 = arith.constant 0 : index
    %c0_23 = arith.constant 0 : index
    %31 = vector.load %arg13[%c0_22, %c0_23] : memref<32x128xf32, #tpu.memory_space<vmem>>, vector<32x128xf32>
    tpu.vector_store %arg13[%c0_22, %c0_23], %30 {strides = array<i32>} : memref<32x128xf32, #tpu.memory_space<vmem>>, vector<32x128xf32>,
    %c0_24 = arith.constant 0 : index
    %c0_25 = arith.constant 0 : index
    %32 = vector.load %arg11[%c0_24, %c0_25] : memref<1x128xf32, #tpu.memory_space<vmem>>, vector<1x128xf32>
    tpu.vector_store %arg11[%c0_24, %c0_25], %10 {strides = array<i32>} : memref<1x128xf32, #tpu.memory_space<vmem>>, vector<1x128xf32>,
    %c1_i32 = arith.constant 1 : i32
    %33 = arith.cmpi eq, %arg2, %c1_i32 : i32
    %34 = arith.extui %33 : i1 to i32
    %c0_i32_26 = arith.constant 0 : i32
    %35 = arith.cmpi ne, %34, %c0_i32_26 : i32
    scf.if %35 {
      %c0_27 = arith.constant 0 : index
      %c0_28 = arith.constant 0 : index
      %36 = vector.load %arg12[%c0_27, %c0_28] : memref<1x128xf32, #tpu.memory_space<vmem>>, vector<1x128xf32>
      %37 = tpu.reciprocal %36 : vector<1x128xf32> -> vector<1x128xf32>
      %c0_29 = arith.constant 0 : index
      %c0_30 = arith.constant 0 : index
      %c0_31 = arith.constant 0 : index
      %38 = vector.load %arg3[%c0_29, %c0_30, %c0_31] : memref<1x32x128xf32, #tpu.memory_space<vmem>>, vector<1x32x128xf32>
      %39 = vector.shape_cast %38 : vector<1x32x128xf32> to vector<32x128xf32>
      %c0_32 = arith.constant 0 : index
      %40 = memref.load %arg8[%c0_32] : memref<1xf32, #tpu.memory_space<smem>>
      %c0_33 = arith.constant 0 : index
      %c0_34 = arith.constant 0 : index
      %41 = vector.load %arg13[%c0_33, %c0_34] : memref<32x128xf32, #tpu.memory_space<vmem>>, vector<32x128xf32>
      %42 = vector.broadcast %37 : vector<1x128xf32> to vector<32x128xf32>
      %43 = arith.mulf %41, %42 : vector<32x128xf32>
      %44 = vector.broadcast %40 : f32 to vector<32x128xf32>
      %45 = arith.mulf %44, %43 : vector<32x128xf32>
      %46 = arith.addf %39, %45 : vector<32x128xf32>
      %c0_35 = arith.constant 0 : index
      %c0_36 = arith.constant 0 : index
      %c0_37 = arith.constant 0 : index
      %47 = vector.load %arg9[%c0_35, %c0_36, %c0_37] : memref<1x32x128xf32, #tpu.memory_space<vmem>>, vector<1x32x128xf32>
      %48 = vector.shape_cast %47 : vector<1x32x128xf32> to vector<32x128xf32>
      %49 = vector.shape_cast %46 : vector<32x128xf32> to vector<1x32x128xf32>
      tpu.vector_store %arg9[%c0_35, %c0_36, %c0_37], %49 {strides = array<i32>} : memref<1x32x128xf32, #tpu.memory_space<vmem>>, vector<1x32x128xf32>,
    } else {
    }
    return
  }
  func.func @transform_0(%arg0: i32, %arg1: i32, %arg2: i32) -> (i32, i32, i32) {
    %c0_i32 = arith.constant 0 : i32
    %c0_i32_0 = arith.constant 0 : i32
    return %arg0, %c0_i32, %arg1 : i32, i32, i32
  }
  func.func @transform_1(%arg0: i32, %arg1: i32, %arg2: i32) -> (i32, i32, i32) {
    %c0_i32 = arith.constant 0 : i32
    %c0_i32_0 = arith.constant 0 : i32
    return %arg0, %arg2, %c0_i32 : i32, i32, i32
  }
  func.func @transform_2(%arg0: i32, %arg1: i32, %arg2: i32) -> (i32, i32, i32) {
    %c0_i32 = arith.constant 0 : i32
    %c0_i32_0 = arith.constant 0 : i32
    return %arg0, %c0_i32, %arg2 : i32, i32, i32
  }
  func.func @transform_3(%arg0: i32, %arg1: i32, %arg2: i32) -> (i32, i32) {
    %c0_i32 = arith.constant 0 : i32
    %c0_i32_0 = arith.constant 0 : i32
    %c0_i32_1 = arith.constant 0 : i32
    return %c0_i32, %c0_i32_0 : i32, i32
  }
  func.func @transform_4(%arg0: i32, %arg1: i32, %arg2: i32) -> (i32, i32) {
    %c0_i32 = arith.constant 0 : i32
    %c0_i32_0 = arith.constant 0 : i32
    %c0_i32_1 = arith.constant 0 : i32
    return %c0_i32, %c0_i32_0 : i32, i32
  }
  func.func @transform_5(%arg0: i32, %arg1: i32, %arg2: i32) -> i32 {
    %c0_i32 = arith.constant 0 : i32
    %c0_i32_0 = arith.constant 0 : i32
    return %c0_i32 : i32
  }
  func.func @transform_6(%arg0: i32, %arg1: i32, %arg2: i32) -> (i32, i32, i32) {
    %c0_i32 = arith.constant 0 : i32
    %c0_i32_0 = arith.constant 0 : i32
    return %arg0, %c0_i32, %arg1 : i32, i32, i32
  }
}

</mosaic_0001>

<llo_original>
// kernel: tpu_custom_call.1
$region0: #{tpu_custom_call.1}
  #allocation0 [shape = 'u32[]', space=smem, size = 0x4, offset = 0x4, fixed_abs, tag = 'smem constant byte address 0x4 - core index']
  #allocation1 [shape = 'u32[144,128]{1,0:T(1,128)}', space=vmem, size = 0x12000, scoped, tag = 'internal scratch']
  #allocation2 [shape = 'bf16[4,128]{1,0:T(4,128)(2,1)}', space=vmem, size = 0x400, scoped, tag = 'scratch operand']
  #allocation3 [shape = 'f32[1,128]{1,0:T(1,128)}', space=vmem, size = 0x200, scoped, tag = 'scratch operand']
  #allocation4 [shape = 'f32[1,128]{1,0:T(1,128)}', space=vmem, size = 0x200, scoped, tag = 'scratch operand']
  #allocation5 [shape = 'f32[32,128]{1,0:T(8,128)}', space=vmem, size = 0x4000, scoped, tag = 'scratch operand']
  #allocation6 [shape = 'f32[1]{0:T(128)S(6)}', space=smem, size = 0x200, scoped, tag = 'scoped memory for tpu_custom_call.1']
  %s0 = inlined_call_operand.vmem [shape: f32[2,32,256], index: 0, kind: input, shape index: {}]
  %s1 = inlined_call_operand.vmem [shape: bf16[2,256,4], index: 1, kind: input, shape index: {}]
  %s2 = inlined_call_operand.vmem [shape: bf16[2,32,256], index: 2, kind: input, shape index: {}]
  %s3 = inlined_call_operand.vmem [shape: bf16[4,32], index: 3, kind: input, shape index: {}]
  %s4 = inlined_call_operand.vmem [shape: f32[4,1], index: 4, kind: input, shape index: {}]
  %s5 = inlined_call_operand.<no memory space> [shape: f32[1], index: 5, kind: input, shape index: {}]
  %s6 = inlined_call_operand.hbm [shape: f32[2,32,256], index: 6, kind: output, shape index: {}]
  %s7 = sld [smem:[#allocation0]]
  $region144: #{tpu_custom_call.1} parent=0
    _
  %s9 = ssub.s32 1, %s7
  %s10 = scalar_select 0, %s9, %s7
  %11 = sst [smem:[#allocation6]] %s5
  $region1: #{tpu_custom_call.1} parent=0
    #allocation7 [shape = 'u8[32768]{0}', space=vmem, size = 0x8000, scoped, tag = 'input window, operand 0']
    #allocation8 [shape = 'u8[16384]{0}', space=vmem, size = 0x4000, scoped, tag = 'input window, operand 2']
    #allocation9 [shape = 'u8[32768]{0}', space=vmem, size = 0x8000, scoped, tag = 'output window, operand 0']
    #allocation10 [shape = 's32[2]{0}', space=sflag, size = 0x8, scoped, tag = 'scoped memory for tpu_custom_call.1']
    %12 = vsyncpa [#allocation10], 0
    %s13 = scalar_lea.sflag [#allocation10], 1
    %14 = vsyncpa %s13, 0
    loop: start=0, step=1, limit=10
    $region2: #{tpu_custom_call.1} parent=1 // loop_pre_header
      _
    $region3: #{tpu_custom_call.1} parent=1 // loop_header
      %s16 = sphi 0, %s20
      %p17 = scmp.ge.s32.totalorder %s16, 10
      %s23 = sphi 0, %s42
      %s24 = sphi 0, %s38
      %s25 = sphi 0, %s34
      %s26 = sphi 0, %s23
      %s27 = sphi 0, %s24
      %s28 = sphi 0, %s25
      %s29 = sphi 0, %s26
      %s30 = sphi 0, %s27
      %s31 = sphi 0, %s28
      %s47 = sphi 0, %s49
      %s50 = sphi 0, %s47
      %s51 = sphi 0, %s50
      %s67 = sphi 0, %s51
      %s75 = sphi 0, %s77
      %s78 = sphi 0, %s75
      %s79 = sphi 0, %s78
      %s95 = sphi 0, %s79
      %s103 = sphi 0, %s105
      %s106 = sphi 0, %s103
      %s107 = sphi 0, %s106
      %s123 = sphi 0, %s107
      %s127 = sphi 0, %s127
      %s129 = sphi 0, %s127
      %s130 = sphi 0, %s129
      %s144 = sphi 0, %s130
      %s148 = sphi 0, %s148
      %s150 = sphi 0, %s148
      %s151 = sphi 0, %s150
      %s165 = sphi 0, %s151
      %s169 = sphi 0, %s169
      %s171 = sphi 0, %s169
      %s172 = sphi 0, %s171
      %s186 = sphi 0, %s172
      %s194 = sphi 0, %s196
      %s197 = sphi 0, %s194
      %s198 = sphi 0, %s197
      %s214 = sphi 0, %s198
    $region4: #{tpu_custom_call.1} parent=1 // loop_header_branch
      %19 = sbr.rel (%p17) target = $region8
    $region5: #{tpu_custom_call.1} parent=1 // loop_body
      %s21 = ssub.s32 %s16, 1
      %s22 = ssub.s32 %s16, 2
      %s32 = sadd.s32 1, %s25
      %p33 = scmp.ge.s32.totalorder %s32, 2
      %s34 = scalar_select %p33, 0, %s32
      %s35 = sadd.s32 1, %s24
      %s36 = scalar_select %p33, %s35, %s24
      %p37 = scmp.ge.s32.totalorder %s36, 2
      %s38 = scalar_select %p37, 0, %s36
      %s39 = sadd.s32 1, %s23
      %s40 = scalar_select %p37, %s39, %s23
      %p41 = scmp.ge.s32.totalorder %s40, 2
      %s42 = scalar_select %p41, 0, %s40
      %s43 = ssub.s32 %s23, %s42
      %s44 = ssub.s32 %s24, %s38
      %s45 = sor.u32 %s43, %s44
      %p46 = scmp.eq.s32.totalorder %s45, 0
      %s48 = sadd.s32 %s47, 1
      %s49 = scalar_select %p46, %s47, %s48
      %p52 = pneg %p46
      %p53 = scmp.eq.s32.totalorder %s16, 7
      %p54 = por %p52, %p53
      %p55 = scmp.ne.s32.totalorder %s47, %s50
      %p56 = scmp.eq.s32.totalorder %s16, 0
      %p57 = por %p55, %p56
      %p58 = scmp.ne.s32.totalorder %s47, %s50
      %p59 = scmp.eq.s32.totalorder %s21, 7
      %p60 = por %p58, %p59
      %p61 = scmp.ne.s32.totalorder %s50, %s51
      %p62 = scmp.eq.s32.totalorder %s21, 0
      %p63 = por %p61, %p62
      %p64 = scmp.ne.s32.totalorder %s50, %s51
      %p65 = scmp.eq.s32.totalorder %s22, 7
      %p66 = por %p64, %p65
      %p68 = scmp.ne.s32.totalorder %s51, %s67
      %p69 = scmp.eq.s32.totalorder %s22, 0
      %p70 = por %p68, %p69
      %s71 = ssub.s32 %s23, %s42
      %s72 = ssub.s32 %s25, %s34
      %s73 = sor.u32 %s71, %s72
      %p74 = scmp.eq.s32.totalorder %s73, 0
      %s76 = sadd.s32 %s75, 1
      %s77 = scalar_select %p74, %s75, %s76
      %p80 = pneg %p74
      %p81 = scmp.eq.s32.totalorder %s16, 7
      %p82 = por %p80, %p81
      %p83 = scmp.ne.s32.totalorder %s75, %s78
      %p84 = scmp.eq.s32.totalorder %s16, 0
      %p85 = por %p83, %p84
      %p86 = scmp.ne.s32.totalorder %s75, %s78
      %p87 = scmp.eq.s32.totalorder %s21, 7
      %p88 = por %p86, %p87
      %p89 = scmp.ne.s32.totalorder %s78, %s79
      %p90 = scmp.eq.s32.totalorder %s21, 0
      %p91 = por %p89, %p90
      %p92 = scmp.ne.s32.totalorder %s78, %s79
      %p93 = scmp.eq.s32.totalorder %s22, 7
      %p94 = por %p92, %p93
      %p96 = scmp.ne.s32.totalorder %s79, %s95
      %p97 = scmp.eq.s32.totalorder %s22, 0
      %p98 = por %p96, %p97
      %s99 = ssub.s32 %s23, %s42
      %s100 = ssub.s32 %s25, %s34
      %s101 = sor.u32 %s99, %s100
      %p102 = scmp.eq.s32.totalorder %s101, 0
      %s104 = sadd.s32 %s103, 1
      %s105 = scalar_select %p102, %s103, %s104
      %p108 = pneg %p102
      %p109 = scmp.eq.s32.totalorder %s16, 7
      %p110 = por %p108, %p109
      %p111 = scmp.ne.s32.totalorder %s103, %s106
      %p112 = scmp.eq.s32.totalorder %s16, 0
      %p113 = por %p111, %p112
      %p114 = scmp.ne.s32.totalorder %s103, %s106
      %p115 = scmp.eq.s32.totalorder %s21, 7
      %p116 = por %p114, %p115
      %p117 = scmp.ne.s32.totalorder %s106, %s107
      %p118 = scmp.eq.s32.totalorder %s21, 0
      %p119 = por %p117, %p118
      %p120 = scmp.ne.s32.totalorder %s106, %s107
      %p121 = scmp.eq.s32.totalorder %s22, 7
      %p122 = por %p120, %p121
      %p124 = scmp.ne.s32.totalorder %s107, %s123
      %p125 = scmp.eq.s32.totalorder %s22, 0
      %p126 = por %p124, %p125
      %s128 = sadd.s32 %s127, 1
      %p131 = scmp.eq.s32.totalorder %s16, 7
      %p132 = scmp.ne.s32.totalorder %s127, %s129
      %p133 = scmp.eq.s32.totalorder %s16, 0
      %p134 = por %p132, %p133
      %p135 = scmp.ne.s32.totalorder %s127, %s129
      %p136 = scmp.eq.s32.totalorder %s21, 7
      %p137 = por %p135, %p136
      %p138 = scmp.ne.s32.totalorder %s129, %s130
      %p139 = scmp.eq.s32.totalorder %s21, 0
      %p140 = por %p138, %p139
      %p141 = scmp.ne.s32.totalorder %s129, %s130
      %p142 = scmp.eq.s32.totalorder %s22, 7
      %p143 = por %p141, %p142
      %p145 = scmp.ne.s32.totalorder %s130, %s144
      %p146 = scmp.eq.s32.totalorder %s22, 0
      %p147 = por %p145, %p146
      %s149 = sadd.s32 %s148, 1
      %p152 = scmp.eq.s32.totalorder %s16, 7
      %p153 = scmp.ne.s32.totalorder %s148, %s150
      %p154 = scmp.eq.s32.totalorder %s16, 0
      %p155 = por %p153, %p154
      %p156 = scmp.ne.s32.totalorder %s148, %s150
      %p157 = scmp.eq.s32.totalorder %s21, 7
      %p158 = por %p156, %p157
      %p159 = scmp.ne.s32.totalorder %s150, %s151
      %p160 = scmp.eq.s32.totalorder %s21, 0
      %p161 = por %p159, %p160
      %p162 = scmp.ne.s32.totalorder %s150, %s151
      %p163 = scmp.eq.s32.totalorder %s22, 7
      %p164 = por %p162, %p163
      %p166 = scmp.ne.s32.totalorder %s151, %s165
      %p167 = scmp.eq.s32.totalorder %s22, 0
      %p168 = por %p166, %p167
      %s170 = sadd.s32 %s169, 1
      %p173 = scmp.eq.s32.totalorder %s16, 7
      %p174 = scmp.ne.s32.totalorder %s169, %s171
      %p175 = scmp.eq.s32.totalorder %s16, 0
      %p176 = por %p174, %p175
      %p177 = scmp.ne.s32.totalorder %s169, %s171
      %p178 = scmp.eq.s32.totalorder %s21, 7
      %p179 = por %p177, %p178
      %p180 = scmp.ne.s32.totalorder %s171, %s172
      %p181 = scmp.eq.s32.totalorder %s21, 0
      %p182 = por %p180, %p181
      %p183 = scmp.ne.s32.totalorder %s171, %s172
      %p184 = scmp.eq.s32.totalorder %s22, 7
      %p185 = por %p183, %p184
      %p187 = scmp.ne.s32.totalorder %s172, %s186
      %p188 = scmp.eq.s32.totalorder %s22, 0
      %p189 = por %p187, %p188
      %s190 = ssub.s32 %s23, %s42
      %s191 = ssub.s32 %s24, %s38
      %s192 = sor.u32 %s190, %s191
      %p193 = scmp.eq.s32.totalorder %s192, 0
      %s195 = sadd.s32 %s194, 1
      %s196 = scalar_select %p193, %s194, %s195
      %p199 = pneg %p193
      %p200 = scmp.eq.s32.totalorder %s16, 7
      %p201 = por %p199, %p200
      %p202 = scmp.ne.s32.totalorder %s194, %s197
      %p203 = scmp.eq.s32.totalorder %s16, 0
      %p204 = por %p202, %p203
      %p205 = scmp.ne.s32.totalorder %s194, %s197
      %p206 = scmp.eq.s32.totalorder %s21, 7
      %p207 = por %p205, %p206
      %p208 = scmp.ne.s32.totalorder %s197, %s198
      %p209 = scmp.eq.s32.totalorder %s21, 0
      %p210 = por %p208, %p209
      %p211 = scmp.ne.s32.totalorder %s197, %s198
      %p212 = scmp.eq.s32.totalorder %s22, 7
      %p213 = por %p211, %p212
      %p215 = scmp.ne.s32.totalorder %s198, %s214
      %p216 = scmp.eq.s32.totalorder %s22, 0
      %p217 = por %p215, %p216
      %p218 = scmp.le.s32.totalorder 1, %s16
      %p219 = scmp.lt.s32.totalorder %s16, 9
      %p220 = pnand %p218, %p219
      %p221 = pneg %p220
      // Predicated region
      $region9: #{tpu_custom_call.1} parent=5 // pred_check
        _
      $region10: #{tpu_custom_call.1} parent=5 // pred_check_branch
        %223 = sbr.rel (%p220) target = $region12
      $region11: #{tpu_custom_call.1} parent=5 // pred_region
        %s224 = ssub.s32 %s16, 1
        // Predicated region
        $region13: #{tpu_custom_call.1} parent=11 // pred_check
          %p225 = pneg %p140
        $region14: #{tpu_custom_call.1} parent=11 // pred_check_branch
          %227 = sbr.rel (%p225) target = $region16
        $region15: #{tpu_custom_call.1} parent=11 // pred_region
          _
        $region16: #{tpu_custom_call.1} parent=11 // pred_fallthru
          _
        // Predicated region
        $region17: #{tpu_custom_call.1} parent=11 // pred_check
          %p228 = pneg %p161
        $region18: #{tpu_custom_call.1} parent=11 // pred_check_branch
          %230 = sbr.rel (%p228) target = $region20
        $region19: #{tpu_custom_call.1} parent=11 // pred_region
          _
        $region20: #{tpu_custom_call.1} parent=11 // pred_fallthru
          _
        // Predicated region
        $region21: #{tpu_custom_call.1} parent=11 // pred_check
          %p231 = pneg %p182
        $region22: #{tpu_custom_call.1} parent=11 // pred_check_branch
          %233 = sbr.rel (%p231) target = $region24
        $region23: #{tpu_custom_call.1} parent=11 // pred_region
          _
        $region24: #{tpu_custom_call.1} parent=11 // pred_fallthru
          _
      $region12: #{tpu_custom_call.1} parent=5 // pred_fallthru
        _
      %p234 = scmp.lt.s32.totalorder %s16, 8
      // Predicated region
      $region25: #{tpu_custom_call.1} parent=5 // pred_check
        %p235 = pneg %p234
      $region26: #{tpu_custom_call.1} parent=5 // pred_check_branch
        %237 = sbr.rel (%p235) target = $region28
      $region27: #{tpu_custom_call.1} parent=5 // pred_region
        // Predicated region
        $region29: #{tpu_custom_call.1} parent=27 // pred_check
          %p238 = pneg %p57
        $region30: #{tpu_custom_call.1} parent=27 // pred_check_branch
          %240 = sbr.rel (%p238) target = $region32
        $region31: #{tpu_custom_call.1} parent=27 // pred_region
          %s241 = sand.u32 %s47, 1
          %s242 = sand.u32 %s47, 1
          %s243 = smul.addr %s242, 32
          %s244 = scalar_lea.vmem [#allocation7], %s243
          %s245 = smul.addr %s23, 8
          %s246 = sadd.s32 %s24, %s245
          %s247 = smul.addr %s246, 8
          %s248 = scalar_lea.vmem %s0, %s247
          // Predicated region
          $region33: #{tpu_custom_call.1} parent=31 // pred_check
            _
          $region34: #{tpu_custom_call.1} parent=31 // pred_check_branch
            %250 = sbr.rel (0) target = $region36
          $region35: #{tpu_custom_call.1} parent=31 // pred_region
            // Predicated region
            $region37: #{tpu_custom_call.1} parent=35 // pred_check
              _
            $region38: #{tpu_custom_call.1} parent=35 // pred_check_branch
              %252 = sbr.rel (0) target = $region40
            $region39: #{tpu_custom_call.1} parent=35 // pred_region
              // Predicated region
              $region52: #{tpu_custom_call.1} parent=39 // pred_check
                _
              $region53: #{tpu_custom_call.1} parent=39 // pred_check_branch
                %274 = sbr.rel (0) target = $region55
              $region54: #{tpu_custom_call.1} parent=39 // pred_region
                loop: start=0, step=1, limit=1
                $region56: #{tpu_custom_call.1} parent=54 // loop_pre_header
                  _
                $region57: #{tpu_custom_call.1} parent=54 // loop_header
                  %s276 = sphi 0, %s280
                  %p277 = scmp.ge.s32.totalorder %s276, 1
                  %s281 = sphi %s248, %s248
                  %s282 = sphi %s244, %s244
                $region58: #{tpu_custom_call.1} parent=54 // loop_header_branch
                  %279 = sbr.rel (%p277) target = $region62
                $region59: #{tpu_custom_call.1} parent=54 // loop_body
                  %v283 = vld [vmem:[%s281] sm:$0xff]
                  %284 = vst [vmem:[%s282] sm:$0xff] %v283
                  %v285 = vld [vmem:[%s281 + $0x10] sm:$0xff]
                  %286 = vst [vmem:[%s282 + $0x8] sm:$0xff] %v285
                  %v287 = vld [vmem:[%s281 + $0x20] sm:$0xff]
                  %288 = vst [vmem:[%s282 + $0x10] sm:$0xff] %v287
                  %v289 = vld [vmem:[%s281 + $0x30] sm:$0xff]
                  %290 = vst [vmem:[%s282 + $0x18] sm:$0xff] %v289
                $region60: #{tpu_custom_call.1} parent=54 // loop_footer
                  %s280 = sadd.s32 1, %s276
                $region61: #{tpu_custom_call.1} parent=54 // loop_footer_branch
                  %275 = sbr.rel target = $region57
                $region62: #{tpu_custom_call.1} parent=54 // loop_exit
                  _
              $region55: #{tpu_custom_call.1} parent=39 // pred_fallthru
                _
              // Predicated region
              $region63: #{tpu_custom_call.1} parent=39 // pred_check
                _
              $region64: #{tpu_custom_call.1} parent=39 // pred_check_branch
                %292 = sbr.rel target = $region66
              $region65: #{tpu_custom_call.1} parent=39 // pred_region
                _
              $region66: #{tpu_custom_call.1} parent=39 // pred_fallthru
                _
            $region40: #{tpu_custom_call.1} parent=35 // pred_fallthru
              _
            // Predicated region
            $region41: #{tpu_custom_call.1} parent=35 // pred_check
              _
            $region42: #{tpu_custom_call.1} parent=35 // pred_check_branch
              %254 = sbr.rel target = $region44
            $region43: #{tpu_custom_call.1} parent=35 // pred_region
              %s256 = ssub.s32 256, 1
              loop: start=0, step=1, limit=1
              $region45: #{tpu_custom_call.1} parent=43 // loop_pre_header
                _
              $region46: #{tpu_custom_call.1} parent=43 // loop_header
                %s258 = sphi 0, %s262
                %p259 = scmp.ge.s32.totalorder %s258, 1
                %s263 = sphi %s248, %s248
                %s264 = sphi %s244, %s244
              $region47: #{tpu_custom_call.1} parent=43 // loop_header_branch
                %261 = sbr.rel (%p259) target = $region51
              $region48: #{tpu_custom_call.1} parent=43 // loop_body
                %v265 = vld [vmem:[%s263] sm:%s256]
                %266 = vst [vmem:[%s264] sm:%s256] %v265
                %v267 = vld [vmem:[%s263 + $0x10] sm:%s256]
                %268 = vst [vmem:[%s264 + $0x8] sm:%s256] %v267
                %v269 = vld [vmem:[%s263 + $0x20] sm:%s256]
                %270 = vst [vmem:[%s264 + $0x10] sm:%s256] %v269
                %v271 = vld [vmem:[%s263 + $0x30] sm:%s256]
                %272 = vst [vmem:[%s264 + $0x18] sm:%s256] %v271
              $region49: #{tpu_custom_call.1} parent=43 // loop_footer
                %s262 = sadd.s32 1, %s258
              $region50: #{tpu_custom_call.1} parent=43 // loop_footer_branch
                %257 = sbr.rel target = $region46
              $region51: #{tpu_custom_call.1} parent=43 // loop_exit
                _
            $region44: #{tpu_custom_call.1} parent=35 // pred_fallthru
              _
          $region36: #{tpu_custom_call.1} parent=31 // pred_fallthru
            _
          %293 = vnop
        $region32: #{tpu_custom_call.1} parent=27 // pred_fallthru
          _
        // Predicated region
        $region67: #{tpu_custom_call.1} parent=27 // pred_check
          %p294 = pneg %p85
        $region68: #{tpu_custom_call.1} parent=27 // pred_check_branch
          %296 = sbr.rel (%p294) target = $region70
        $region69: #{tpu_custom_call.1} parent=27 // pred_region
          %s297 = smul.u32 16, %s25
          %p298 = scmp.lt.s32.totalorder %s23, 1
          %s299 = scalar_select %p298, %s23, 1
          %p300 = scmp.lt.s32.totalorder %s297, 31
          %s301 = scalar_select %p300, %s297, 31
          %s302 = smul.addr %s299, 32
          %s303 = sadd.s32 %s301, %s302
          %s304 = smul.addr %s303, 4
          %s305 = scalar_lea.vmem %s1, %s304
          %s306 = smul.u32 16, %s25
        $region70: #{tpu_custom_call.1} parent=27 // pred_fallthru
          _
        // Predicated region
        $region71: #{tpu_custom_call.1} parent=27 // pred_check
          %p307 = pneg %p113
        $region72: #{tpu_custom_call.1} parent=27 // pred_check_branch
          %309 = sbr.rel (%p307) target = $region74
        $region73: #{tpu_custom_call.1} parent=27 // pred_region
          %s310 = sand.u32 %s103, 1
          %s311 = sand.u32 %s103, 1
          %s312 = smul.addr %s311, 16
          %s313 = scalar_lea.vmem [#allocation8], %s312
          %s314 = smul.addr %s23, 8
          %s315 = sadd.s32 %s25, %s314
          %s316 = smul.addr %s315, 4
          %s317 = scalar_lea.vmem %s2, %s316
          // Predicated region
          $region75: #{tpu_custom_call.1} parent=73 // pred_check
            _
          $region76: #{tpu_custom_call.1} parent=73 // pred_check_branch
            %319 = sbr.rel (0) target = $region78
          $region77: #{tpu_custom_call.1} parent=73 // pred_region
            // Predicated region
            $region79: #{tpu_custom_call.1} parent=77 // pred_check
              _
            $region80: #{tpu_custom_call.1} parent=77 // pred_check_branch
              %321 = sbr.rel target = $region82
            $region81: #{tpu_custom_call.1} parent=77 // pred_region
              // Predicated region
              $region94: #{tpu_custom_call.1} parent=81 // pred_check
                _
              $region95: #{tpu_custom_call.1} parent=81 // pred_check_branch
                %343 = sbr.rel (0) target = $region97
              $region96: #{tpu_custom_call.1} parent=81 // pred_region
                loop: start=0, step=1, limit=1
                $region98: #{tpu_custom_call.1} parent=96 // loop_pre_header
                  _
                $region99: #{tpu_custom_call.1} parent=96 // loop_header
                  %s345 = sphi 0, %s349
                  %p346 = scmp.ge.s32.totalorder %s345, 1
                  %s350 = sphi %s317, %s317
                  %s351 = sphi %s313, %s313
                $region100: #{tpu_custom_call.1} parent=96 // loop_header_branch
                  %348 = sbr.rel (%p346) target = $region104
                $region101: #{tpu_custom_call.1} parent=96 // loop_body
                  _
                $region102: #{tpu_custom_call.1} parent=96 // loop_footer
                  %s349 = sadd.s32 1, %s345
                $region103: #{tpu_custom_call.1} parent=96 // loop_footer_branch
                  %344 = sbr.rel target = $region99
                $region104: #{tpu_custom_call.1} parent=96 // loop_exit
                  _
                %s353 = ssub.s32 16, 1
                loop: start=0, step=1, limit=1
                $region105: #{tpu_custom_call.1} parent=96 // loop_pre_header
                  _
                $region106: #{tpu_custom_call.1} parent=96 // loop_header
                  %s355 = sphi 0, %s359
                  %p356 = scmp.ge.s32.totalorder %s355, 1
                  %s360 = sphi %s317, %s317
                  %s361 = sphi %s313, %s313
                $region107: #{tpu_custom_call.1} parent=96 // loop_header_branch
                  %358 = sbr.rel (%p356) target = $region111
                $region108: #{tpu_custom_call.1} parent=96 // loop_body
                  %v362 = vld [vmem:[%s360] sm:%s353]
                  %363 = vst [vmem:[%s361] sm:%s353] %v362
                  %v364 = vld [vmem:[%s360 + $0x8] sm:%s353]
                  %365 = vst [vmem:[%s361 + $0x4] sm:%s353] %v364
                  %v366 = vld [vmem:[%s360 + $0x10] sm:%s353]
                  %367 = vst [vmem:[%s361 + $0x8] sm:%s353] %v366
                  %v368 = vld [vmem:[%s360 + $0x18] sm:%s353]
                  %369 = vst [vmem:[%s361 + $0xc] sm:%s353] %v368
                $region109: #{tpu_custom_call.1} parent=96 // loop_footer
                  %s359 = sadd.s32 1, %s355
                $region110: #{tpu_custom_call.1} parent=96 // loop_footer_branch
                  %354 = sbr.rel target = $region106
                $region111: #{tpu_custom_call.1} parent=96 // loop_exit
                  _
              $region97: #{tpu_custom_call.1} parent=81 // pred_fallthru
                _
            $region82: #{tpu_custom_call.1} parent=77 // pred_fallthru
              _
            // Predicated region
            $region83: #{tpu_custom_call.1} parent=77 // pred_check
              _
            $region84: #{tpu_custom_call.1} parent=77 // pred_check_branch
              %323 = sbr.rel (0) target = $region86
            $region85: #{tpu_custom_call.1} parent=77 // pred_region
              %s325 = ssub.s32 16, 1
              loop: start=0, step=1, limit=1
              $region87: #{tpu_custom_call.1} parent=85 // loop_pre_header
                _
              $region88: #{tpu_custom_call.1} parent=85 // loop_header
                %s327 = sphi 0, %s331
                %p328 = scmp.ge.s32.totalorder %s327, 1
                %s332 = sphi %s317, %s317
                %s333 = sphi %s313, %s313
              $region89: #{tpu_custom_call.1} parent=85 // loop_header_branch
                %330 = sbr.rel (%p328) target = $region93
              $region90: #{tpu_custom_call.1} parent=85 // loop_body
                %v334 = vld [vmem:[%s332] sm:%s325]
                %335 = vst [vmem:[%s333] sm:%s325] %v334
                %v336 = vld [vmem:[%s332 + $0x8] sm:%s325]
                %337 = vst [vmem:[%s333 + $0x4] sm:%s325] %v336
                %v338 = vld [vmem:[%s332 + $0x10] sm:%s325]
                %339 = vst [vmem:[%s333 + $0x8] sm:%s325] %v338
                %v340 = vld [vmem:[%s332 + $0x18] sm:%s325]
                %341 = vst [vmem:[%s333 + $0xc] sm:%s325] %v340
              $region91: #{tpu_custom_call.1} parent=85 // loop_footer
                %s331 = sadd.s32 1, %s327
              $region92: #{tpu_custom_call.1} parent=85 // loop_footer_branch
                %326 = sbr.rel target = $region88
              $region93: #{tpu_custom_call.1} parent=85 // loop_exit
                _
            $region86: #{tpu_custom_call.1} parent=77 // pred_fallthru
              _
          $region78: #{tpu_custom_call.1} parent=73 // pred_fallthru
            _
          %370 = vnop
        $region74: #{tpu_custom_call.1} parent=27 // pred_fallthru
          _
      $region28: #{tpu_custom_call.1} parent=5 // pred_fallthru
        _
      %p371 = scmp.le.s32.totalorder 1, %s16
      %p372 = scmp.lt.s32.totalorder %s16, 9
      %p373 = pnand %p371, %p372
      %p374 = pneg %p373
      // Predicated region
      $region112: #{tpu_custom_call.1} parent=5 // pred_check
        _
      $region113: #{tpu_custom_call.1} parent=5 // pred_check_branch
        %376 = sbr.rel (%p373) target = $region115
      $region114: #{tpu_custom_call.1} parent=5 // pred_region
        %s377 = ssub.s32 %s16, 1
        %s378 = sand.u32 %s50, 1
        %s379 = sand.u32 %s50, 1
        %s380 = smul.addr %s379, 32
        %s381 = scalar_lea.vmem [#allocation7], %s380
        // Predicated region
        $region116: #{tpu_custom_call.1} parent=114 // pred_check
          %p382 = pneg %p63
        $region117: #{tpu_custom_call.1} parent=114 // pred_check_branch
          %384 = sbr.rel (%p382) target = $region119
        $region118: #{tpu_custom_call.1} parent=114 // pred_region
          _
        $region119: #{tpu_custom_call.1} parent=114 // pred_fallthru
          _
        %s385 = sand.u32 %s106, 1
        %s386 = sand.u32 %s106, 1
        %s387 = smul.addr %s386, 16
        %s388 = scalar_lea.vmem [#allocation8], %s387
        // Predicated region
        $region120: #{tpu_custom_call.1} parent=114 // pred_check
          %p389 = pneg %p119
        $region121: #{tpu_custom_call.1} parent=114 // pred_check_branch
          %391 = sbr.rel (%p389) target = $region123
        $region122: #{tpu_custom_call.1} parent=114 // pred_region
          _
        $region123: #{tpu_custom_call.1} parent=114 // pred_fallthru
          _
        %s392 = sand.u32 %s50, 1
        %s393 = sand.u32 %s50, 1
        %s394 = smul.addr %s393, 32
        %s395 = scalar_lea.vmem [#allocation7], %s394
        %p396 = pneg %p63
        %p397 = pneg %p60
        %s398 = smul.u32 16, %s28
        %p399 = scmp.lt.s32.totalorder %s26, 1
        %s400 = scalar_select %p399, %s26, 1
        %p401 = scmp.lt.s32.totalorder %s398, 31
        %s402 = scalar_select %p401, %s398, 31
        %s403 = smul.addr %s400, 32
        %s404 = sadd.s32 %s402, %s403
        %s405 = smul.addr %s404, 4
        %s406 = scalar_lea.vmem %s1, %s405
        %p407 = pneg %p91
        %p408 = pneg %p88
        %s409 = sand.u32 %s106, 1
        %s410 = sand.u32 %s106, 1
        %s411 = smul.addr %s410, 16
        %s412 = scalar_lea.vmem [#allocation8], %s411
        %p413 = pneg %p119
        %p414 = pneg %p116
        %p415 = pneg %p140
        %p416 = pneg %p137
        %p417 = pneg %p161
        %p418 = pneg %p158
        %p419 = pneg %p182
        %p420 = pneg %p179
        %p421 = pneg %p210
        %p422 = pneg %p207
        %s423 = sand.u32 %s197, 1
        %s424 = scalar_lea.sflag [#allocation10], %s423
        %s425 = sand.u32 %s197, 1
        %s426 = smul.addr %s425, 32
        %s427 = scalar_lea.vmem [#allocation9], %s426
        %s428 = smul.u32 16, %s28
        %p429 = scmp.lt.s32.totalorder %s26, 1
        %s430 = scalar_select %p429, %s26, 1
        %p431 = scmp.lt.s32.totalorder %s428, 31
        %s432 = scalar_select %p431, %s428, 31
        %s433 = smul.addr %s430, 32
        %s434 = sadd.s32 %s432, %s433
        %s435 = smul.addr %s434, 4
        %s436 = scalar_lea.vmem %s1, %s435
        %s437 = smul.u32 16, %s28
        %p440 = scmp.eq.s32.totalorder %s28, 0
        // Predicated region
        $region124: #{tpu_custom_call.1} parent=114 // pred_check
          %p441 = pneg %p440
        $region125: #{tpu_custom_call.1} parent=114 // pred_check_branch
          %443 = sbr.rel (%p441) target = $region127
        $region126: #{tpu_custom_call.1} parent=114 // pred_region
          %444 = vst [vmem:[#allocation3] sm:$0x1] -inf
          %445 = vst [vmem:[#allocation4] sm:$0x1] 0.0
          %446 = vst [vmem:[#allocation5] sm:$0xff] 0.0
          %447 = vst [vmem:[#allocation5 + $0x8] sm:$0xff] 0.0
          %448 = vst [vmem:[#allocation5 + $0x10] sm:$0xff] 0.0
          %449 = vst [vmem:[#allocation5 + $0x18] sm:$0xff] 0.0
          %v450 = vld [vmem:[%s381] sm:$0xff]
          %v451 = vld [vmem:[%s381 + $0x8] sm:$0xff]
          %v452 = vld [vmem:[%s381 + $0x10] sm:$0xff]
          %v453 = vld [vmem:[%s381 + $0x18] sm:$0xff]
          %v454 = vpack.c.bf16 %v451, %v450
          %v455 = vpack.c.bf16 %v453, %v452
          %v456 = vld [vmem:[%s3] sm:$0x3]
          %v457 = vld [vmem:[%s4] sm:$0xf]
          %459 = vset.pattern.permute.xlu0 0
          %460 = vperm.xlu0 %459, %v457
          %v461 = vpop.permute.xlu0 %460
          %vm463 = vcmask 261120
          %v465 = vsel %vm463, %v456, 0
          %467 = vmatprep.subr.bf16.mxu0 0
          %468 = vmatpush1.bf16.msra.mxu0 0
          %469 = vmatprep.subr.bf16.mxu0 0
          %470 = vmatpush1.bf16.msra.mxu0 0
          %471 = vmatprep.subr.bf16.mxu0 0
          %472 = vmatpush1.bf16.msra.mxu0 0
          %473 = vmatprep.subr.bf16.mxu0 0
          %474 = vmatpush1.bf16.msra.mxu0 0
          %475 = vmatprep.subr.bf16.mxu0 0
          %476 = vmatpush1.bf16.msra.mxu0 0
          %477 = vmatprep.subr.bf16.mxu0 0
          %478 = vmatpush1.bf16.msra.mxu0 0
          %479 = vmatprep.subr.bf16.mxu0 0
          %480 = vmatpush1.bf16.msra.mxu0 %v455
          %481 = vmatprep.subr.bf16.mxu0 0
          %482 = vmatpush1.bf16.msra.mxu0 %v454
          %483 = vmatprep.subr.bf16.mxu0 0
          %484 = vmatpush2.bf16.msra.mxu0 0
          %485 = vmatprep.subr.bf16.mxu0 0
          %486 = vmatpush2.bf16.msra.mxu0 0
          %487 = vmatprep.subr.bf16.mxu0 0
          %488 = vmatpush2.bf16.msra.mxu0 0
          %489 = vmatprep.subr.bf16.mxu0 0
          %490 = vmatpush2.bf16.msra.mxu0 0
          %491 = vmatprep.subr.bf16.mxu0 0
          %492 = vmatpush2.bf16.msra.mxu0 0
          %493 = vmatprep.subr.bf16.mxu0 0
          %494 = vmatpush2.bf16.msra.mxu0 0
          %495 = vmatprep.subr.bf16.mxu0 0
          %496 = vmatpush2.bf16.msra.mxu0 0
          %497 = vmatprep.subr.bf16.mxu0 0
          %498 = vmatpush2.bf16.msra.mxu0 0
          %499 = vmatprep.mubr.bf16.mxu0 0
          %500 = vmatmul.mubr.bf16.gmra.mxu0 %v465
          %v501 = vpop.f32.mrf.mxu0
          %v502 = vadd.f32 %v461, %v501
          %v503 = vpop.f32.mrf.mxu0
          %v504 = vpop.f32.mrf.mxu0
          %v505 = vpop.f32.mrf.mxu0
          %506 = vdwg.mxu0
          %v507 = vpack.c.bf16 %v502, %v502
          %508 = vst [vmem:[#allocation2] sm:$0x3] %v507
        $region127: #{tpu_custom_call.1} parent=114 // pred_fallthru
          _
        %v509 = vld [vmem:[%s436] sm:$0xf]
        %v510 = vld [vmem:[%s436 + $0x4] sm:$0xf]
        %v511 = vld [vmem:[%s436 + $0x8] sm:$0xf]
        %v512 = vld [vmem:[%s436 + $0xc] sm:$0xf]
        %v513 = vld [vmem:[%s436 + $0x10] sm:$0xf]
        %v514 = vld [vmem:[%s436 + $0x14] sm:$0xf]
        %v515 = vld [vmem:[%s436 + $0x18] sm:$0xf]
        %v516 = vld [vmem:[%s436 + $0x1c] sm:$0xf]
        %v517 = vld [vmem:[%s436 + $0x20] sm:$0xf]
        %v518 = vld [vmem:[%s436 + $0x24] sm:$0xf]
        %v519 = vld [vmem:[%s436 + $0x28] sm:$0xf]
        %v520 = vld [vmem:[%s436 + $0x2c] sm:$0xf]
        %v521 = vld [vmem:[%s436 + $0x30] sm:$0xf]
        %v522 = vld [vmem:[%s436 + $0x34] sm:$0xf]
        %v523 = vld [vmem:[%s436 + $0x38] sm:$0xf]
        %v524 = vld [vmem:[%s436 + $0x3c] sm:$0xf]
        %v525 = vld [vmem:[#allocation2] sm:$0x3]
        %v542 = vunpack.c.l.b16 %v509
        %v543 = vunpack.c.l.b16 %v510
        %v544 = vunpack.c.l.b16 %v511
        %v545 = vunpack.c.l.b16 %v512
        %v546 = vunpack.c.l.b16 %v513
        %v547 = vunpack.c.l.b16 %v514
        %v548 = vunpack.c.l.b16 %v515
        %v549 = vunpack.c.l.b16 %v516
        %v550 = vunpack.c.l.b16 %v517
        %v551 = vunpack.c.l.b16 %v518
        %v552 = vunpack.c.l.b16 %v519
        %v553 = vunpack.c.l.b16 %v520
        %v554 = vunpack.c.l.b16 %v521
        %v555 = vunpack.c.l.b16 %v522
        %v556 = vunpack.c.l.b16 %v523
        %v557 = vunpack.c.l.b16 %v524
        %v558 = vpack.c.b16 %v543, %v542
        %v559 = vpack.c.b16 %v545, %v544
        %v560 = vpack.c.b16 %v547, %v546
        %v561 = vpack.c.b16 %v549, %v548
        %v562 = vpack.c.b16 %v551, %v550
        %v563 = vpack.c.b16 %v553, %v552
        %v564 = vpack.c.b16 %v555, %v554
        %v565 = vpack.c.b16 %v557, %v556
        %vm566 = vcmask 31744
        %v568 = vsel %vm566, %v558, 0
        %v571 = vsel %vm566, %v559, 0
        %v574 = vsel %vm566, %v560, 0
        %v577 = vsel %vm566, %v561, 0
        %v580 = vsel %vm566, %v562, 0
        %v583 = vsel %vm566, %v563, 0
        %v586 = vsel %vm566, %v564, 0
        %v589 = vsel %vm566, %v565, 0
        %vm591 = vcmask 1041408
        %v593 = vsel %vm591, %v525, 0
        %595 = vmatprep.subr.bf16.mxu0 0
        %596 = vmatpush1.bf16.msra.mxu0 0
        %597 = vmatprep.subr.bf16.mxu0 0
        %598 = vmatpush1.bf16.msra.mxu0 0
        %599 = vmatprep.subr.bf16.mxu0 0
        %600 = vmatpush1.bf16.msra.mxu0 0
        %601 = vmatprep.subr.bf16.mxu0 0
        %602 = vmatpush1.bf16.msra.mxu0 0
        %603 = vmatprep.subr.bf16.mxu0 0
        %604 = vmatpush1.bf16.msra.mxu0 0
        %605 = vmatprep.subr.bf16.mxu0 0
        %606 = vmatpush1.bf16.msra.mxu0 0
        %607 = vmatprep.subr.bf16.mxu0 0
        %608 = vmatpush1.bf16.msra.mxu0 0
        %609 = vmatprep.subr.bf16.mxu0 0
        %610 = vmatpush1.bf16.msra.mxu0 %v593
        %611 = vmatprep.subr.bf16.mxu0 0
        %612 = vmatpush2.bf16.msra.mxu0 0
        %613 = vmatprep.subr.bf16.mxu0 0
        %614 = vmatpush2.bf16.msra.mxu0 0
        %615 = vmatprep.subr.bf16.mxu0 0
        %616 = vmatpush2.bf16.msra.mxu0 0
        %617 = vmatprep.subr.bf16.mxu0 0
        %618 = vmatpush2.bf16.msra.mxu0 0
        %619 = vmatprep.subr.bf16.mxu0 0
        %620 = vmatpush2.bf16.msra.mxu0 0
        %621 = vmatprep.subr.bf16.mxu0 0
        %622 = vmatpush2.bf16.msra.mxu0 0
        %623 = vmatprep.subr.bf16.mxu0 0
        %624 = vmatpush2.bf16.msra.mxu0 0
        %625 = vmatprep.subr.bf16.mxu0 0
        %626 = vmatpush2.bf16.msra.mxu0 0
        %627 = vmatprep.mubr.bf16.mxu0 0
        %628 = vmatmul.mubr.bf16.gmra.mxu0 %v568
        %v629 = vpop.f32.mrf.mxu0
        %v630 = vadd.f32 0.0, %v629
        %v631 = vpop.f32.mrf.mxu0
        %v632 = vpop.f32.mrf.mxu0
        %v633 = vadd.f32 0.0, %v632
        %v634 = vpop.f32.mrf.mxu0
        %635 = vmatprep.mubr.bf16.mxu0 0
        %636 = vmatmul.mubr.bf16.gmra.mxu0 %v571
        %v637 = vpop.f32.mrf.mxu0
        %v638 = vadd.f32 0.0, %v637
        %v639 = vpop.f32.mrf.mxu0
        %v640 = vpop.f32.mrf.mxu0
        %v641 = vadd.f32 0.0, %v640
        %v642 = vpop.f32.mrf.mxu0
        %643 = vmatprep.mubr.bf16.mxu0 0
        %644 = vmatmul.mubr.bf16.gmra.mxu0 %v574
        %v645 = vpop.f32.mrf.mxu0
        %v646 = vadd.f32 0.0, %v645
        %v647 = vpop.f32.mrf.mxu0
        %v648 = vpop.f32.mrf.mxu0
        %v649 = vadd.f32 0.0, %v648
        %v650 = vpop.f32.mrf.mxu0
        %651 = vmatprep.mubr.bf16.mxu0 0
        %652 = vmatmul.mubr.bf16.gmra.mxu0 %v577
        %v653 = vpop.f32.mrf.mxu0
        %v654 = vadd.f32 0.0, %v653
        %v655 = vpop.f32.mrf.mxu0
        %v656 = vpop.f32.mrf.mxu0
        %v657 = vadd.f32 0.0, %v656
        %v658 = vpop.f32.mrf.mxu0
        %659 = vmatprep.mubr.bf16.mxu0 0
        %660 = vmatmul.mubr.bf16.gmra.mxu0 %v580
        %v661 = vpop.f32.mrf.mxu0
        %v662 = vadd.f32 0.0, %v661
        %v663 = vpop.f32.mrf.mxu0
        %v664 = vpop.f32.mrf.mxu0
        %v665 = vadd.f32 0.0, %v664
        %v666 = vpop.f32.mrf.mxu0
        %667 = vmatprep.mubr.bf16.mxu0 0
        %668 = vmatmul.mubr.bf16.gmra.mxu0 %v583
        %v669 = vpop.f32.mrf.mxu0
        %v670 = vadd.f32 0.0, %v669
        %v671 = vpop.f32.mrf.mxu0
        %v672 = vpop.f32.mrf.mxu0
        %v673 = vadd.f32 0.0, %v672
        %v674 = vpop.f32.mrf.mxu0
        %675 = vmatprep.mubr.bf16.mxu0 0
        %676 = vmatmul.mubr.bf16.gmra.mxu0 %v586
        %v677 = vpop.f32.mrf.mxu0
        %v678 = vadd.f32 0.0, %v677
        %v679 = vpop.f32.mrf.mxu0
        %v680 = vpop.f32.mrf.mxu0
        %v681 = vadd.f32 0.0, %v680
        %v682 = vpop.f32.mrf.mxu0
        %683 = vmatprep.mubr.bf16.mxu0 0
        %684 = vmatmul.mubr.bf16.gmra.mxu0 %v589
        %v685 = vpop.f32.mrf.mxu0
        %v686 = vadd.f32 0.0, %v685
        %v687 = vpop.f32.mrf.mxu0
        %v688 = vpop.f32.mrf.mxu0
        %v689 = vadd.f32 0.0, %v688
        %v690 = vpop.f32.mrf.mxu0
        %691 = vdwg.mxu0
        %v692 = vld [vmem:[#allocation3] sm:$0x1]
        %v693 = vmax.f32 %v630, %v646
        %v694 = vmax.f32 %v633, %v649
        %v695 = vmax.f32 %v638, %v654
        %v696 = vmax.f32 %v641, %v657
        %v697 = vmax.f32 %v693, %v662
        %v698 = vmax.f32 %v694, %v665
        %v699 = vmax.f32 %v695, %v670
        %v700 = vmax.f32 %v696, %v673
        %v701 = vmax.f32 %v697, %v678
        %v702 = vmax.f32 %v698, %v681
        %v703 = vmax.f32 %v699, %v686
        %v704 = vmax.f32 %v700, %v689
        %v705 = vmax.f32 %v701, %v702
        %v706 = vmax.f32 %v703, %v704
        %v707 = vmax.f32 %v705, %v706
        %v708 = vrot.slane %v707, 4
        %v709 = vmax.f32 %v707, %v708
        %v710 = vrot.slane %v709, 2
        %v711 = vmax.f32 %v709, %v710
        %v712 = vrot.slane %v711, 1
        %v713 = vmax.f32 %v711, %v712
        %v714 = vmax.f32 %v692, %v713
        %v715 = vsub.f32 %v692, %v714
        %v716 = vmul.f32 %v715, 1.442695
        %v717 = vpow.pop %v716
        %v719 = vlaneseq
        %v720 = vshrl.u32 %v719, 7
        %v721 = vsub.s32 0, %v720
        %v722 = vrot.slane %v714, %v721
        %v724 = vsub.f32 %v630, %v722
        %v725 = vsub.f32 %v633, %v722
        %v726 = vsub.f32 %v638, %v722
        %v727 = vsub.f32 %v641, %v722
        %v728 = vsub.f32 %v646, %v722
        %v729 = vsub.f32 %v649, %v722
        %v730 = vsub.f32 %v654, %v722
        %v731 = vsub.f32 %v657, %v722
        %v732 = vsub.f32 %v662, %v722
        %v733 = vsub.f32 %v665, %v722
        %v734 = vsub.f32 %v670, %v722
        %v735 = vsub.f32 %v673, %v722
        %v736 = vsub.f32 %v678, %v722
        %v737 = vsub.f32 %v681, %v722
        %v738 = vsub.f32 %v686, %v722
        %v739 = vsub.f32 %v689, %v722
        %v740 = vmul.f32 %v724, 1.442695
        %v741 = vpow.pop %v740
        %v742 = vmul.f32 %v725, 1.442695
        %v743 = vpow.pop %v742
        %v744 = vmul.f32 %v726, 1.442695
        %v745 = vpow.pop %v744
        %v746 = vmul.f32 %v727, 1.442695
        %v747 = vpow.pop %v746
        %v748 = vmul.f32 %v728, 1.442695
        %v749 = vpow.pop %v748
        %v750 = vmul.f32 %v729, 1.442695
        %v751 = vpow.pop %v750
        %v752 = vmul.f32 %v730, 1.442695
        %v753 = vpow.pop %v752
        %v754 = vmul.f32 %v731, 1.442695
        %v755 = vpow.pop %v754
        %v756 = vmul.f32 %v732, 1.442695
        %v757 = vpow.pop %v756
        %v758 = vmul.f32 %v733, 1.442695
        %v759 = vpow.pop %v758
        %v760 = vmul.f32 %v734, 1.442695
        %v761 = vpow.pop %v760
        %v762 = vmul.f32 %v735, 1.442695
        %v763 = vpow.pop %v762
        %v764 = vmul.f32 %v736, 1.442695
        %v765 = vpow.pop %v764
        %v766 = vmul.f32 %v737, 1.442695
        %v767 = vpow.pop %v766
        %v768 = vmul.f32 %v738, 1.442695
        %v769 = vpow.pop %v768
        %v770 = vmul.f32 %v739, 1.442695
        %v771 = vpow.pop %v770
        %v772 = vpack.c.bf16 %v743, %v741
        %v773 = vpack.c.bf16 %v747, %v745
        %v774 = vpack.c.bf16 %v751, %v749
        %v775 = vpack.c.bf16 %v755, %v753
        %v776 = vpack.c.bf16 %v759, %v757
        %v777 = vpack.c.bf16 %v763, %v761
        %v778 = vpack.c.bf16 %v767, %v765
        %v779 = vpack.c.bf16 %v771, %v769
        %780 = vmatprep.subr.bf16.mxu0 0
        %781 = vmatpush1.bf16.msra.mxu0 %v779
        %782 = vmatprep.subr.bf16.mxu0 0
        %783 = vmatpush1.bf16.msra.mxu0 %v778
        %784 = vmatprep.subr.bf16.mxu0 0
        %785 = vmatpush1.bf16.msra.mxu0 %v777
        %786 = vmatprep.subr.bf16.mxu0 0
        %787 = vmatpush1.bf16.msra.mxu0 %v776
        %788 = vmatprep.subr.bf16.mxu0 0
        %789 = vmatpush1.bf16.msra.mxu0 %v775
        %790 = vmatprep.subr.bf16.mxu0 0
        %791 = vmatpush1.bf16.msra.mxu0 %v774
        %792 = vmatprep.subr.bf16.mxu0 0
        %793 = vmatpush1.bf16.msra.mxu0 %v773
        %794 = vmatprep.subr.bf16.mxu0 0
        %795 = vmatpush1.bf16.msra.mxu0 %v772
        %796 = vmatprep.subr.bf16.mxu0 0
        %797 = vmatpush2.bf16.msra.mxu0 0
        %798 = vmatprep.subr.bf16.mxu0 0
        %799 = vmatpush2.bf16.msra.mxu0 0
        %800 = vmatprep.subr.bf16.mxu0 0
        %801 = vmatpush2.bf16.msra.mxu0 0
        %802 = vmatprep.subr.bf16.mxu0 0
        %803 = vmatpush2.bf16.msra.mxu0 0
        %804 = vmatprep.subr.bf16.mxu0 0
        %805 = vmatpush2.bf16.msra.mxu0 0
        %806 = vmatprep.subr.bf16.mxu0 0
        %807 = vmatpush2.bf16.msra.mxu0 0
        %808 = vmatprep.subr.bf16.mxu0 0
        %809 = vmatpush2.bf16.msra.mxu0 0
        %810 = vmatprep.subr.bf16.mxu0 0
        %811 = vmatpush2.bf16.msra.mxu0 0
        %812 = vmatprep.mubr.bf16.mxu0 0
        %813 = vmatmul.mubr.bf16.gmra.mxu0 1065369472
        %v814 = vpop.f32.mrf.mxu0
        %v815 = vadd.f32 0.0, %v814
        %v816 = vpop.f32.mrf.mxu0
        %v817 = vpop.f32.mrf.mxu0
        %v818 = vpop.f32.mrf.mxu0
        %819 = vdwg.mxu0
        %v820 = vld [vmem:[#allocation4] sm:$0x1]
        %v821 = vmul.f32 %v717, %v820
        %v822 = vadd.f32 %v821, %v815
        %823 = vst [vmem:[#allocation4] sm:$0x1] %v822
        %v824 = vld [vmem:[#allocation5] sm:$0xff]
        %v825 = vld [vmem:[#allocation5 + $0x8] sm:$0xff]
        %v826 = vld [vmem:[#allocation5 + $0x10] sm:$0xff]
        %v827 = vld [vmem:[#allocation5 + $0x18] sm:$0xff]
        %v829 = vlaneseq
        %v830 = vshrl.u32 %v829, 7
        %v831 = vsub.s32 0, %v830
        %v832 = vrot.slane %v717, %v831
        %v834 = vmul.f32 %v832, %v824
        %v835 = vmul.f32 %v832, %v825
        %v836 = vmul.f32 %v832, %v826
        %v837 = vmul.f32 %v832, %v827
        %v838 = vld [vmem:[%s388] sm:$0xf]
        %v839 = vld [vmem:[%s388 + $0x4] sm:$0xf]
        %v840 = vld [vmem:[%s388 + $0x8] sm:$0xf]
        %v841 = vld [vmem:[%s388 + $0xc] sm:$0xf]
        %v846 = vunpack.c.l.b16 %v838
        %v847 = vunpack.c.l.b16 %v839
        %v848 = vunpack.c.l.b16 %v840
        %v849 = vunpack.c.l.b16 %v841
        %v850 = vpack.c.b16 %v847, %v846
        %v851 = vpack.c.b16 %v849, %v848
        %854 = vmatprep.subr.bf16.mxu0 0
        %855 = vmatpush1.bf16.msra.mxu0 %v779
        %856 = vmatprep.subr.bf16.mxu0 0
        %857 = vmatpush1.bf16.msra.mxu0 %v778
        %858 = vmatprep.subr.bf16.mxu0 0
        %859 = vmatpush1.bf16.msra.mxu0 %v777
        %860 = vmatprep.subr.bf16.mxu0 0
        %861 = vmatpush1.bf16.msra.mxu0 %v776
        %862 = vmatprep.subr.bf16.mxu0 0
        %863 = vmatpush1.bf16.msra.mxu0 %v775
        %864 = vmatprep.subr.bf16.mxu0 0
        %865 = vmatpush1.bf16.msra.mxu0 %v774
        %866 = vmatprep.subr.bf16.mxu0 0
        %867 = vmatpush1.bf16.msra.mxu0 %v773
        %868 = vmatprep.subr.bf16.mxu0 0
        %869 = vmatpush1.bf16.msra.mxu0 %v772
        %870 = vmatprep.subr.bf16.mxu0 0
        %871 = vmatpush2.bf16.msra.mxu0 0
        %872 = vmatprep.subr.bf16.mxu0 0
        %873 = vmatpush2.bf16.msra.mxu0 0
        %874 = vmatprep.subr.bf16.mxu0 0
        %875 = vmatpush2.bf16.msra.mxu0 0
        %876 = vmatprep.subr.bf16.mxu0 0
        %877 = vmatpush2.bf16.msra.mxu0 0
        %878 = vmatprep.subr.bf16.mxu0 0
        %879 = vmatpush2.bf16.msra.mxu0 0
        %880 = vmatprep.subr.bf16.mxu0 0
        %881 = vmatpush2.bf16.msra.mxu0 0
        %882 = vmatprep.subr.bf16.mxu0 0
        %883 = vmatpush2.bf16.msra.mxu0 0
        %884 = vmatprep.subr.bf16.mxu0 0
        %885 = vmatpush2.bf16.msra.mxu0 0
        %886 = vmatprep.mubr.bf16.mxu0 0
        %887 = vmatmul.mubr.bf16.gmra.mxu0 %v850
        %v888 = vpop.f32.mrf.mxu0
        %v889 = vadd.f32 0.0, %v888
        %v890 = vpop.f32.mrf.mxu0
        %v891 = vpop.f32.mrf.mxu0
        %v892 = vadd.f32 0.0, %v891
        %v893 = vpop.f32.mrf.mxu0
        %894 = vmatprep.mubr.bf16.mxu0 0
        %895 = vmatmul.mubr.bf16.gmra.mxu0 %v851
        %v896 = vpop.f32.mrf.mxu0
        %v897 = vadd.f32 0.0, %v896
        %v898 = vpop.f32.mrf.mxu0
        %v899 = vpop.f32.mrf.mxu0
        %v900 = vadd.f32 0.0, %v899
        %v901 = vpop.f32.mrf.mxu0
        %902 = vdwg.mxu0
        %v903 = vadd.f32 %v834, %v889
        %v904 = vadd.f32 %v835, %v892
        %v905 = vadd.f32 %v836, %v897
        %v906 = vadd.f32 %v837, %v900
        %907 = vst [vmem:[#allocation5] sm:$0xff] %v903
        %908 = vst [vmem:[#allocation5 + $0x8] sm:$0xff] %v904
        %909 = vst [vmem:[#allocation5 + $0x10] sm:$0xff] %v905
        %910 = vst [vmem:[#allocation5 + $0x18] sm:$0xff] %v906
        %911 = vst [vmem:[#allocation3] sm:$0x1] %v714
        %p912 = scmp.eq.s32.totalorder %s28, 1
        // Predicated region
        $region128: #{tpu_custom_call.1} parent=114 // pred_check
          %p913 = pneg %p912
        $region129: #{tpu_custom_call.1} parent=114 // pred_check_branch
          %915 = sbr.rel (%p913) target = $region131
        $region130: #{tpu_custom_call.1} parent=114 // pred_region
          %v916 = vld [vmem:[#allocation4] sm:$0x1]
          %v917 = vrcp.pop %v916
          %v918 = vld [vmem:[%s381] sm:$0xff]
          %v919 = vld [vmem:[%s381 + $0x8] sm:$0xff]
          %v920 = vld [vmem:[%s381 + $0x10] sm:$0xff]
          %v921 = vld [vmem:[%s381 + $0x18] sm:$0xff]
          %s922 = sld [smem:[#allocation6]]
          %v923 = vld [vmem:[#allocation5] sm:$0xff]
          %v924 = vld [vmem:[#allocation5 + $0x8] sm:$0xff]
          %v925 = vld [vmem:[#allocation5 + $0x10] sm:$0xff]
          %v926 = vld [vmem:[#allocation5 + $0x18] sm:$0xff]
          %v928 = vlaneseq
          %v929 = vshrl.u32 %v928, 7
          %v930 = vsub.s32 0, %v929
          %v931 = vrot.slane %v917, %v930
          %v933 = vmul.f32 %v923, %v931
          %v934 = vmul.f32 %v924, %v931
          %v935 = vmul.f32 %v925, %v931
          %v936 = vmul.f32 %v926, %v931
          %v937 = vstv %s922
          %v938 = vmul.f32 %v937, %v933
          %v939 = vmul.f32 %v937, %v934
          %v940 = vmul.f32 %v937, %v935
          %v941 = vmul.f32 %v937, %v936
          %v942 = vadd.f32 %v918, %v938
          %v943 = vadd.f32 %v919, %v939
          %v944 = vadd.f32 %v920, %v940
          %v945 = vadd.f32 %v921, %v941
          %946 = vst [vmem:[%s427] sm:$0xff] %v942
          %947 = vst [vmem:[%s427 + $0x8] sm:$0xff] %v943
          %948 = vst [vmem:[%s427 + $0x10] sm:$0xff] %v944
          %949 = vst [vmem:[%s427 + $0x18] sm:$0xff] %v945
        $region131: #{tpu_custom_call.1} parent=114 // pred_fallthru
          _
        %s950 = sand.u32 %s197, 1
        %s951 = scalar_lea.sflag [#allocation10], %s950
        %s952 = sand.u32 %s197, 1
        %s953 = smul.addr %s952, 32
        %s954 = scalar_lea.vmem [#allocation9], %s953
        // Predicated region
        $region132: #{tpu_custom_call.1} parent=114 // pred_check
          %p955 = pneg %p207
        $region133: #{tpu_custom_call.1} parent=114 // pred_check_branch
          %957 = sbr.rel (%p955) target = $region135
        $region134: #{tpu_custom_call.1} parent=114 // pred_region
          %s959 = ssub.s32 512, 512
          %960 = vsyncadd %s951, %s959
          %s961 = smul.addr %s26, 8
          %s962 = sadd.s32 %s27, %s961
          %s963 = smul.addr %s962, 128
          %s964 = scalar_lea.hbm %s6, %s963
          %s965 = sshll.u32 %s954, 4
          %s966 = int_to_ptr.vmem [resolvable:$true] %s965
          %971 = dma.vmem_to_hbm [thread:$0]  %s966, 512, %s964, %s951, 128, 256, 8
        $region135: #{tpu_custom_call.1} parent=114 // pred_fallthru
          _
      $region115: #{tpu_custom_call.1} parent=5 // pred_fallthru
        _
      %p972 = scmp.le.s32.totalorder 2, %s16
      // Predicated region
      $region136: #{tpu_custom_call.1} parent=5 // pred_check
        %p973 = pneg %p972
      $region137: #{tpu_custom_call.1} parent=5 // pred_check_branch
        %975 = sbr.rel (%p973) target = $region139
      $region138: #{tpu_custom_call.1} parent=5 // pred_region
        %s976 = ssub.s32 %s16, 2
        // Predicated region
        $region140: #{tpu_custom_call.1} parent=138 // pred_check
          %p977 = pneg %p213
        $region141: #{tpu_custom_call.1} parent=138 // pred_check_branch
          %979 = sbr.rel (%p977) target = $region143
        $region142: #{tpu_custom_call.1} parent=138 // pred_region
          %s980 = sand.u32 %s198, 1
          %s981 = scalar_lea.sflag [#allocation10], %s980
          %s982 = sand.u32 %s198, 1
          %s983 = smul.addr %s982, 32
          %s984 = scalar_lea.vmem [#allocation9], %s983
          %985 = dma.done %s981, 512
        $region143: #{tpu_custom_call.1} parent=138 // pred_fallthru
          _
      $region139: #{tpu_custom_call.1} parent=5 // pred_fallthru
        _
    $region6: #{tpu_custom_call.1} parent=1 // loop_footer
      %s20 = sadd.s32 1, %s16
    $region7: #{tpu_custom_call.1} parent=1 // loop_footer_branch
      %15 = sbr.rel target = $region3
    $region8: #{tpu_custom_call.1} parent=1 // loop_exit
      _
    %986 = vsyncpa [#allocation10], 1
    %s987 = scalar_lea.sflag [#allocation10], 1
    %988 = vsyncpa %s987, 1

</llo_original>
